<compile_context>
chip_gen: v5e
topology: v5e:2x2
jax: 0.10.0
libtpu: 0.0.40
codegen_flags: <defaults>
</compile_context>

<pallas_src>
import jax
import jax.numpy as jnp
from jax.experimental import pallas as pl
from jax.experimental.pallas import tpu as pltpu

# ----------------------------- model configuration -----------------------------
D = 8              # input_dim
N_DEPTH = 4        # must be even (asserted in IM_rNVP.__init__)
N_SPLIT_AT = 3     # split position (alternates with sign across depth, as in BR_layers.flow_mapping)
WIDTH = 32         # hidden width of the coupling MLP (NN2: Linear->relu->Linear->relu->Linear)
FLOW_COUPLING = 0  # default: additive coupling (shift = exp(log_gamma) * tanh(NN2(z1)))

LANE = 128         # TPU lane width


def _splits(input_dim, n_split_at, n_depth):
    out, sign = [], -1
    for _ in range(n_depth):
        sign *= -1
        out.append((n_split_at * sign + input_dim) % input_dim)
    return out


# --------------------------------- Pallas kernel --------------------------------
def im_rnvp_kernel(x_ref, dpar_ref, hpar_ref, w1t_ref, w2t_ref, wft_ref, out_ref):
    # x_ref: (D, block_n)  -- batch on lanes
    # dpar_ref: (n_depth, 4, D, 1)   [an_b, an_scale, gamma, bf]  (flip pre-folded)
    # hpar_ref: (n_depth, 2, W, 1)   [b1, b2]
    # w1t_ref : (n_depth, W, D)      W1_pad^T  (flip pre-folded)
    # w2t_ref : (n_depth, W, W)      W2^T
    # wft_ref : (n_depth, D, W)      Wf_pad^T  (flip pre-folded)
    d, _ = x_ref.shape
    n_depth = w1t_ref.shape[0]

    z = x_ref[...]  # (D, bn) float32

    for i in range(n_depth):  # static unroll, n_depth small
        b = dpar_ref[i, 0]        # (D, 1)
        scale = dpar_ref[i, 1]    # (D, 1) = exp(an_logs), precomputed
        gamma = dpar_ref[i, 2]    # (D, 1) = exp(log_gamma) zero-padded on z1 rows
        bf = dpar_ref[i, 3]       # (D, 1) zero-padded on z1 rows
        b1 = hpar_ref[i, 0]       # (W, 1)
        b2 = hpar_ref[i, 1]       # (W, 1)

        # ---- actnorm: z = (z + b) * scale (logdet handled at pack/wrapper time) ----
        z = (z + b) * scale

        # ---- additive affine coupling (flow_coupling == 0), transposed form ----
        # W1^T zero-padded on columns >= split (MLP only sees z1);
        # Wf^T / bf / gamma zero-padded on rows < split (only z2 is shifted).
        h = jnp.maximum(jnp.dot(w1t_ref[i], z, preferred_element_type=jnp.float32) + b1, 0.0)
        h = jnp.maximum(jnp.dot(w2t_ref[i], h, preferred_element_type=jnp.float32) + b2, 0.0)
        s = jnp.dot(wft_ref[i], h, preferred_element_type=jnp.float32) + bf
        z = z + gamma * jnp.tanh(s)

        # (feature flip folded into the next layer's parameters; nothing to do here)

    # ---- log standard Gaussian prior, reduced over features (lane-dense output) ----
    logp = -0.5 * jnp.sum(z * z, axis=0, keepdims=True) + d * (-0.5 * jnp.log(2.0 * jnp.pi))
    out_ref[...] = logp


def im_rnvp_forward(x, packed, *, block_n=1024):
    B, d = x.shape
    # lane-aligned block: large enough to amortize per-step overhead, no larger than padded batch
    block_n = max(LANE, min(block_n, pl.cdiv(B, LANE) * LANE))
    pad_B = pl.cdiv(B, block_n) * block_n

    # batch on lanes: pass x^T, zero-padded along the batch axis
    xt = jnp.zeros((d, pad_B), jnp.float32).at[:, :B].set(x.T.astype(jnp.float32))

    names = ("dpar", "hpar", "w1t", "w2t", "wft")
    params = [packed[k] for k in names]

    def full_spec(a):
        nd = a.ndim
        return pl.BlockSpec(a.shape, lambda i, _nd=nd: (0,) * _nd)

    out_t = pl.pallas_call(
        im_rnvp_kernel,
        out_shape=jax.ShapeDtypeStruct((1, pad_B), jnp.float32),
        grid=(pad_B // block_n,),
        in_specs=[pl.BlockSpec((d, block_n), lambda i: (0, i))] + [full_spec(a) for a in params],
        out_specs=pl.BlockSpec((1, block_n), lambda i: (0, i)),
        compiler_params=pltpu.CompilerParams(dimension_semantics=("parallel",)),
    )(xt, *params)

    # batch-independent actnorm log-determinant hoisted out of the kernel
    return out_t[0, :B, None] + packed["logdet"]


# ------------------------- parameter init / packing (glue) -----------------------
def init_params(key, input_dim, n_depth, n_split_at, width):
    splits = _splits(input_dim, n_split_at, n_depth)
    layers = []
    for i, s in enumerate(splits):
        n_out = input_dim - s
        ks = jax.random.split(jax.random.fold_in(key, i), 9)
        layers.append(dict(
            an_b=0.1 * jax.random.normal(ks[0], (1, input_dim), jnp.float32),
            an_logs=0.1 * jax.random.normal(ks[1], (1, input_dim), jnp.float32),
            w1=jax.random.normal(ks[2], (s, width), jnp.float32) / (float(s) ** 0.5),
            b1=0.1 * jax.random.normal(ks[3], (1, width), jnp.float32),
            w2=jax.random.normal(ks[4], (width, width), jnp.float32) / (float(width) ** 0.5),
            b2=0.1 * jax.random.normal(ks[5], (1, width), jnp.float32),
            wf=jax.random.normal(ks[6], (width, n_out), jnp.float32) / (float(width) ** 0.5),
            bf=0.1 * jax.random.normal(ks[7], (1, n_out), jnp.float32),
            lg=0.1 * jax.random.normal(ks[8], (1, n_out), jnp.float32),
        ))
    return layers, splits


def pack_params(layers, splits, input_dim, width):
    """Pack params for the transposed (batch-on-lanes) kernel.

    - pads coupling weights so the MLP sees only z1 and shifts only z2,
    - pre-exponentiates actnorm scale and gamma,
    - folds the per-layer feature reversal into odd layers' parameters,
    - hoists the (batch-independent) actnorm logdet to a scalar.
    """
    dpar, hpar, w1t, w2t, wft = [], [], [], [], []
    logdet = jnp.zeros((), jnp.float32)
    for i, (l, s) in enumerate(zip(layers, splits)):
        logdet = logdet + jnp.sum(l["an_logs"])
        b = l["an_b"].reshape(input_dim)
        scale = jnp.exp(l["an_logs"]).reshape(input_dim)
        gamma = jnp.zeros((input_dim,), jnp.float32).at[s:].set(jnp.exp(l["lg"]).reshape(-1))
        bf = jnp.zeros((input_dim,), jnp.float32).at[s:].set(l["bf"].reshape(-1))
        W1 = jnp.zeros((input_dim, width), jnp.float32).at[:s, :].set(l["w1"])   # (D, W), rows >= s zero
        Wf = jnp.zeros((width, input_dim), jnp.float32).at[:, s:].set(l["wf"])   # (W, D), cols < s zero

        if i % 2 == 1:
            # fold the feature flip accumulated from the previous layer into this layer's params
            b, scale, gamma, bf = b[::-1], scale[::-1], gamma[::-1], bf[::-1]
            W1 = W1[::-1, :]
            Wf = Wf[:, ::-1]

        dpar.append(jnp.stack([b, scale, gamma, bf])[:, :, None])                      # (4, D, 1)
        hpar.append(jnp.stack([l["b1"].reshape(width), l["b2"].reshape(width)])[:, :, None])  # (2, W, 1)
        w1t.append(W1.T)      # (W, D)
        w2t.append(l["w2"].T)  # (W, W)
        wft.append(Wf.T)      # (D, W)

    return dict(
        dpar=jnp.stack(dpar).astype(jnp.float32),
        hpar=jnp.stack(hpar).astype(jnp.float32),
        w1t=jnp.stack(w1t).astype(jnp.float32),
        w2t=jnp.stack(w2t).astype(jnp.float32),
        wft=jnp.stack(wft).astype(jnp.float32),
        logdet=logdet.astype(jnp.float32),
    )


# ------------------------------- pure-JAX reference ------------------------------
def im_rnvp_reference(x, layers, splits):
    z = x
    obj = jnp.zeros((x.shape[0], 1), jnp.float32)
    for l, s in zip(layers, splits):
        z = (z + l["an_b"]) * jnp.exp(l["an_logs"])
        obj = obj + jnp.sum(l["an_logs"])
        z1, z2 = z[:, :s], z[:, s:]
        h = jax.nn.relu(z1 @ l["w1"] + l["b1"])
        h = jax.nn.relu(h @ l["w2"] + l["b2"])
        h = h @ l["wf"] + l["bf"]
        z2 = z2 + jnp.exp(l["lg"]) * jnp.tanh(h)
        z = jnp.concatenate([z1, z2], axis=1)
        z = z[:, ::-1]
    obj = obj + jnp.sum(-0.5 * jnp.log(2.0 * jnp.pi) - 0.5 * z * z, axis=1, keepdims=True)
    return obj


# --------------------------------------- main ------------------------------------
if __name__ == "__main__":
    key = jax.random.PRNGKey(0)
    kx, kp = jax.random.split(key)
    B = 16
    x = jax.random.normal(kx, (B, D), jnp.float32)

    layers, splits = init_params(kp, D, N_DEPTH, N_SPLIT_AT, WIDTH)
    packed = pack_params(layers, splits, D, WIDTH)

    out = im_rnvp_forward(x, packed)
    out = jax.block_until_ready(out)

    ref = im_rnvp_reference(x, layers, splits)
    assert out.shape == (B, 1), out.shape
    assert bool(jnp.allclose(out, ref, rtol=2e-3, atol=2e-3)), (out, ref)
    print("KERNEL_OK")
</pallas_src>

<mosaic_0001>
module attributes {stable_mosaic.version = 11 : i64} {
  func.func @im_rnvp_kernel(%arg0: i32, %arg1: memref<8x128xf32, #tpu.memory_space<vmem>>, %arg2: memref<4x4x8x1xf32, #tpu.memory_space<vmem>>, %arg3: memref<4x2x32x1xf32, #tpu.memory_space<vmem>>, %arg4: memref<4x32x8xf32, #tpu.memory_space<vmem>>, %arg5: memref<4x32x32xf32, #tpu.memory_space<vmem>>, %arg6: memref<4x8x32xf32, #tpu.memory_space<vmem>>, %arg7: memref<1x128xf32, #tpu.memory_space<vmem>>) attributes {dimension_semantics = [#tpu.dimension_semantics<parallel>], iteration_bounds = array<i64: 1>, scalar_prefetch = 0 : i64, scratch_operands = 0 : i64, tpu.core_type = #tpu.core_type<tc>, window_params = [{transform_indices = @transform_0, window_bounds = array<i64: 8, 128>}, {pipeline_mode = #tpu.pipeline_mode<synchronous>, transform_indices = @transform_1, window_bounds = array<i64: 4, 4, 8, 1>}, {pipeline_mode = #tpu.pipeline_mode<synchronous>, transform_indices = @transform_2, window_bounds = array<i64: 4, 2, 32, 1>}, {pipeline_mode = #tpu.pipeline_mode<synchronous>, transform_indices = @transform_3, window_bounds = array<i64: 4, 32, 8>}, {pipeline_mode = #tpu.pipeline_mode<synchronous>, transform_indices = @transform_4, window_bounds = array<i64: 4, 32, 32>}, {pipeline_mode = #tpu.pipeline_mode<synchronous>, transform_indices = @transform_5, window_bounds = array<i64: 4, 8, 32>}, {transform_indices = @transform_6, window_bounds = array<i64: 1, 128>}]} {
    %c0 = arith.constant 0 : index
    %c0_0 = arith.constant 0 : index
    %0 = vector.load %arg1[%c0, %c0_0] : memref<8x128xf32, #tpu.memory_space<vmem>>, vector<8x128xf32>
    %c0_1 = arith.constant 0 : index
    %c0_2 = arith.constant 0 : index
    %c0_3 = arith.constant 0 : index
    %c0_4 = arith.constant 0 : index
    %1 = vector.load %arg2[%c0_1, %c0_2, %c0_3, %c0_4] : memref<4x4x8x1xf32, #tpu.memory_space<vmem>>, vector<1x1x8x1xf32>
    %2 = vector.shape_cast %1 : vector<1x1x8x1xf32> to vector<8x1xf32>
    %c0_5 = arith.constant 0 : index
    %c1 = arith.constant 1 : index
    %c0_6 = arith.constant 0 : index
    %c0_7 = arith.constant 0 : index
    %3 = vector.load %arg2[%c0_5, %c1, %c0_6, %c0_7] : memref<4x4x8x1xf32, #tpu.memory_space<vmem>>, vector<1x1x8x1xf32>
    %4 = vector.shape_cast %3 : vector<1x1x8x1xf32> to vector<8x1xf32>
    %c0_8 = arith.constant 0 : index
    %c2 = arith.constant 2 : index
    %c0_9 = arith.constant 0 : index
    %c0_10 = arith.constant 0 : index
    %5 = vector.load %arg2[%c0_8, %c2, %c0_9, %c0_10] : memref<4x4x8x1xf32, #tpu.memory_space<vmem>>, vector<1x1x8x1xf32>
    %6 = vector.shape_cast %5 : vector<1x1x8x1xf32> to vector<8x1xf32>
    %c0_11 = arith.constant 0 : index
    %c3 = arith.constant 3 : index
    %c0_12 = arith.constant 0 : index
    %c0_13 = arith.constant 0 : index
    %7 = vector.load %arg2[%c0_11, %c3, %c0_12, %c0_13] : memref<4x4x8x1xf32, #tpu.memory_space<vmem>>, vector<1x1x8x1xf32>
    %8 = vector.shape_cast %7 : vector<1x1x8x1xf32> to vector<8x1xf32>
    %c0_14 = arith.constant 0 : index
    %c0_15 = arith.constant 0 : index
    %c0_16 = arith.constant 0 : index
    %c0_17 = arith.constant 0 : index
    %9 = vector.load %arg3[%c0_14, %c0_15, %c0_16, %c0_17] : memref<4x2x32x1xf32, #tpu.memory_space<vmem>>, vector<1x1x32x1xf32>
    %10 = vector.shape_cast %9 : vector<1x1x32x1xf32> to vector<32x1xf32>
    %c0_18 = arith.constant 0 : index
    %c1_19 = arith.constant 1 : index
    %c0_20 = arith.constant 0 : index
    %c0_21 = arith.constant 0 : index
    %11 = vector.load %arg3[%c0_18, %c1_19, %c0_20, %c0_21] : memref<4x2x32x1xf32, #tpu.memory_space<vmem>>, vector<1x1x32x1xf32>
    %12 = vector.shape_cast %11 : vector<1x1x32x1xf32> to vector<32x1xf32>
    %13 = vector.broadcast %2 : vector<8x1xf32> to vector<8x128xf32>
    %14 = arith.addf %0, %13 : vector<8x128xf32>
    %15 = vector.broadcast %4 : vector<8x1xf32> to vector<8x128xf32>
    %16 = arith.mulf %14, %15 : vector<8x128xf32>
    %c0_22 = arith.constant 0 : index
    %c0_23 = arith.constant 0 : index
    %c0_24 = arith.constant 0 : index
    %17 = vector.load %arg4[%c0_22, %c0_23, %c0_24] : memref<4x32x8xf32, #tpu.memory_space<vmem>>, vector<1x32x8xf32>
    %18 = vector.shape_cast %17 : vector<1x32x8xf32> to vector<32x8xf32>
    %cst = arith.constant dense<0.000000e+00> : vector<32x128xf32>
    %19 = tpu.matmul %18, %16, %cst {dimension_numbers = #tpu.dot_dimension_numbers<[1], [0], [0], [1], [0, 0, 1, 1], [], []>} : vector<32x8xf32>, vector<8x128xf32>, vector<32x128xf32> -> vector<32x128xf32>
    %20 = vector.broadcast %10 : vector<32x1xf32> to vector<32x128xf32>
    %21 = arith.addf %19, %20 : vector<32x128xf32>
    %cst_25 = arith.constant 0.000000e+00 : f32
    %22 = vector.broadcast %cst_25 : f32 to vector<32x128xf32>
    %23 = arith.maximumf %21, %22 : vector<32x128xf32>
    %c0_26 = arith.constant 0 : index
    %c0_27 = arith.constant 0 : index
    %c0_28 = arith.constant 0 : index
    %24 = vector.load %arg5[%c0_26, %c0_27, %c0_28] : memref<4x32x32xf32, #tpu.memory_space<vmem>>, vector<1x32x32xf32>
    %25 = vector.shape_cast %24 : vector<1x32x32xf32> to vector<32x32xf32>
    %cst_29 = arith.constant dense<0.000000e+00> : vector<32x128xf32>
    %26 = tpu.matmul %25, %23, %cst_29 {dimension_numbers = #tpu.dot_dimension_numbers<[1], [0], [0], [1], [0, 0, 1, 1], [], []>} : vector<32x32xf32>, vector<32x128xf32>, vector<32x128xf32> -> vector<32x128xf32>
    %27 = vector.broadcast %12 : vector<32x1xf32> to vector<32x128xf32>
    %28 = arith.addf %26, %27 : vector<32x128xf32>
    %cst_30 = arith.constant 0.000000e+00 : f32
    %29 = vector.broadcast %cst_30 : f32 to vector<32x128xf32>
    %30 = arith.maximumf %28, %29 : vector<32x128xf32>
    %c0_31 = arith.constant 0 : index
    %c0_32 = arith.constant 0 : index
    %c0_33 = arith.constant 0 : index
    %31 = vector.load %arg6[%c0_31, %c0_32, %c0_33] : memref<4x8x32xf32, #tpu.memory_space<vmem>>, vector<1x8x32xf32>
    %32 = vector.shape_cast %31 : vector<1x8x32xf32> to vector<8x32xf32>
    %cst_34 = arith.constant dense<0.000000e+00> : vector<8x128xf32>
    %33 = tpu.matmul %32, %30, %cst_34 {dimension_numbers = #tpu.dot_dimension_numbers<[1], [0], [0], [1], [0, 0, 1, 1], [], []>} : vector<8x32xf32>, vector<32x128xf32>, vector<8x128xf32> -> vector<8x128xf32>
    %34 = vector.broadcast %8 : vector<8x1xf32> to vector<8x128xf32>
    %35 = arith.addf %33, %34 : vector<8x128xf32>
    %36 = math.tanh %35 : vector<8x128xf32>
    %37 = vector.broadcast %6 : vector<8x1xf32> to vector<8x128xf32>
    %38 = arith.mulf %37, %36 : vector<8x128xf32>
    %39 = arith.addf %16, %38 : vector<8x128xf32>
    %c1_35 = arith.constant 1 : index
    %c0_36 = arith.constant 0 : index
    %c0_37 = arith.constant 0 : index
    %c0_38 = arith.constant 0 : index
    %40 = vector.load %arg2[%c1_35, %c0_36, %c0_37, %c0_38] : memref<4x4x8x1xf32, #tpu.memory_space<vmem>>, vector<1x1x8x1xf32>
    %41 = vector.shape_cast %40 : vector<1x1x8x1xf32> to vector<8x1xf32>
    %c1_39 = arith.constant 1 : index
    %c1_40 = arith.constant 1 : index
    %c0_41 = arith.constant 0 : index
    %c0_42 = arith.constant 0 : index
    %42 = vector.load %arg2[%c1_39, %c1_40, %c0_41, %c0_42] : memref<4x4x8x1xf32, #tpu.memory_space<vmem>>, vector<1x1x8x1xf32>
    %43 = vector.shape_cast %42 : vector<1x1x8x1xf32> to vector<8x1xf32>
    %c1_43 = arith.constant 1 : index
    %c2_44 = arith.constant 2 : index
    %c0_45 = arith.constant 0 : index
    %c0_46 = arith.constant 0 : index
    %44 = vector.load %arg2[%c1_43, %c2_44, %c0_45, %c0_46] : memref<4x4x8x1xf32, #tpu.memory_space<vmem>>, vector<1x1x8x1xf32>
    %45 = vector.shape_cast %44 : vector<1x1x8x1xf32> to vector<8x1xf32>
    %c1_47 = arith.constant 1 : index
    %c3_48 = arith.constant 3 : index
    %c0_49 = arith.constant 0 : index
    %c0_50 = arith.constant 0 : index
    %46 = vector.load %arg2[%c1_47, %c3_48, %c0_49, %c0_50] : memref<4x4x8x1xf32, #tpu.memory_space<vmem>>, vector<1x1x8x1xf32>
    %47 = vector.shape_cast %46 : vector<1x1x8x1xf32> to vector<8x1xf32>
    %c1_51 = arith.constant 1 : index
    %c0_52 = arith.constant 0 : index
    %c0_53 = arith.constant 0 : index
    %c0_54 = arith.constant 0 : index
    %48 = vector.load %arg3[%c1_51, %c0_52, %c0_53, %c0_54] : memref<4x2x32x1xf32, #tpu.memory_space<vmem>>, vector<1x1x32x1xf32>
    %49 = vector.shape_cast %48 : vector<1x1x32x1xf32> to vector<32x1xf32>
    %c1_55 = arith.constant 1 : index
    %c1_56 = arith.constant 1 : index
    %c0_57 = arith.constant 0 : index
    %c0_58 = arith.constant 0 : index
    %50 = vector.load %arg3[%c1_55, %c1_56, %c0_57, %c0_58] : memref<4x2x32x1xf32, #tpu.memory_space<vmem>>, vector<1x1x32x1xf32>
    %51 = vector.shape_cast %50 : vector<1x1x32x1xf32> to vector<32x1xf32>
    %52 = vector.broadcast %41 : vector<8x1xf32> to vector<8x128xf32>
    %53 = arith.addf %39, %52 : vector<8x128xf32>
    %54 = vector.broadcast %43 : vector<8x1xf32> to vector<8x128xf32>
    %55 = arith.mulf %53, %54 : vector<8x128xf32>
    %c1_59 = arith.constant 1 : index
    %c0_60 = arith.constant 0 : index
    %c0_61 = arith.constant 0 : index
    %56 = vector.load %arg4[%c1_59, %c0_60, %c0_61] : memref<4x32x8xf32, #tpu.memory_space<vmem>>, vector<1x32x8xf32>
    %57 = vector.shape_cast %56 : vector<1x32x8xf32> to vector<32x8xf32>
    %cst_62 = arith.constant dense<0.000000e+00> : vector<32x128xf32>
    %58 = tpu.matmul %57, %55, %cst_62 {dimension_numbers = #tpu.dot_dimension_numbers<[1], [0], [0], [1], [0, 0, 1, 1], [], []>} : vector<32x8xf32>, vector<8x128xf32>, vector<32x128xf32> -> vector<32x128xf32>
    %59 = vector.broadcast %49 : vector<32x1xf32> to vector<32x128xf32>
    %60 = arith.addf %58, %59 : vector<32x128xf32>
    %cst_63 = arith.constant 0.000000e+00 : f32
    %61 = vector.broadcast %cst_63 : f32 to vector<32x128xf32>
    %62 = arith.maximumf %60, %61 : vector<32x128xf32>
    %c1_64 = arith.constant 1 : index
    %c0_65 = arith.constant 0 : index
    %c0_66 = arith.constant 0 : index
    %63 = vector.load %arg5[%c1_64, %c0_65, %c0_66] : memref<4x32x32xf32, #tpu.memory_space<vmem>>, vector<1x32x32xf32>
    %64 = vector.shape_cast %63 : vector<1x32x32xf32> to vector<32x32xf32>
    %cst_67 = arith.constant dense<0.000000e+00> : vector<32x128xf32>
    %65 = tpu.matmul %64, %62, %cst_67 {dimension_numbers = #tpu.dot_dimension_numbers<[1], [0], [0], [1], [0, 0, 1, 1], [], []>} : vector<32x32xf32>, vector<32x128xf32>, vector<32x128xf32> -> vector<32x128xf32>
    %66 = vector.broadcast %51 : vector<32x1xf32> to vector<32x128xf32>
    %67 = arith.addf %65, %66 : vector<32x128xf32>
    %cst_68 = arith.constant 0.000000e+00 : f32
    %68 = vector.broadcast %cst_68 : f32 to vector<32x128xf32>
    %69 = arith.maximumf %67, %68 : vector<32x128xf32>
    %c1_69 = arith.constant 1 : index
    %c0_70 = arith.constant 0 : index
    %c0_71 = arith.constant 0 : index
    %70 = vector.load %arg6[%c1_69, %c0_70, %c0_71] : memref<4x8x32xf32, #tpu.memory_space<vmem>>, vector<1x8x32xf32>
    %71 = vector.shape_cast %70 : vector<1x8x32xf32> to vector<8x32xf32>
    %cst_72 = arith.constant dense<0.000000e+00> : vector<8x128xf32>
    %72 = tpu.matmul %71, %69, %cst_72 {dimension_numbers = #tpu.dot_dimension_numbers<[1], [0], [0], [1], [0, 0, 1, 1], [], []>} : vector<8x32xf32>, vector<32x128xf32>, vector<8x128xf32> -> vector<8x128xf32>
    %73 = vector.broadcast %47 : vector<8x1xf32> to vector<8x128xf32>
    %74 = arith.addf %72, %73 : vector<8x128xf32>
    %75 = math.tanh %74 : vector<8x128xf32>
    %76 = vector.broadcast %45 : vector<8x1xf32> to vector<8x128xf32>
    %77 = arith.mulf %76, %75 : vector<8x128xf32>
    %78 = arith.addf %55, %77 : vector<8x128xf32>
    %c2_73 = arith.constant 2 : index
    %c0_74 = arith.constant 0 : index
    %c0_75 = arith.constant 0 : index
    %c0_76 = arith.constant 0 : index
    %79 = vector.load %arg2[%c2_73, %c0_74, %c0_75, %c0_76] : memref<4x4x8x1xf32, #tpu.memory_space<vmem>>, vector<1x1x8x1xf32>
    %80 = vector.shape_cast %79 : vector<1x1x8x1xf32> to vector<8x1xf32>
    %c2_77 = arith.constant 2 : index
    %c1_78 = arith.constant 1 : index
    %c0_79 = arith.constant 0 : index
    %c0_80 = arith.constant 0 : index
    %81 = vector.load %arg2[%c2_77, %c1_78, %c0_79, %c0_80] : memref<4x4x8x1xf32, #tpu.memory_space<vmem>>, vector<1x1x8x1xf32>
    %82 = vector.shape_cast %81 : vector<1x1x8x1xf32> to vector<8x1xf32>
    %c2_81 = arith.constant 2 : index
    %c2_82 = arith.constant 2 : index
    %c0_83 = arith.constant 0 : index
    %c0_84 = arith.constant 0 : index
    %83 = vector.load %arg2[%c2_81, %c2_82, %c0_83, %c0_84] : memref<4x4x8x1xf32, #tpu.memory_space<vmem>>, vector<1x1x8x1xf32>
    %84 = vector.shape_cast %83 : vector<1x1x8x1xf32> to vector<8x1xf32>
    %c2_85 = arith.constant 2 : index
    %c3_86 = arith.constant 3 : index
    %c0_87 = arith.constant 0 : index
    %c0_88 = arith.constant 0 : index
    %85 = vector.load %arg2[%c2_85, %c3_86, %c0_87, %c0_88] : memref<4x4x8x1xf32, #tpu.memory_space<vmem>>, vector<1x1x8x1xf32>
    %86 = vector.shape_cast %85 : vector<1x1x8x1xf32> to vector<8x1xf32>
    %c2_89 = arith.constant 2 : index
    %c0_90 = arith.constant 0 : index
    %c0_91 = arith.constant 0 : index
    %c0_92 = arith.constant 0 : index
    %87 = vector.load %arg3[%c2_89, %c0_90, %c0_91, %c0_92] : memref<4x2x32x1xf32, #tpu.memory_space<vmem>>, vector<1x1x32x1xf32>
    %88 = vector.shape_cast %87 : vector<1x1x32x1xf32> to vector<32x1xf32>
    %c2_93 = arith.constant 2 : index
    %c1_94 = arith.constant 1 : index
    %c0_95 = arith.constant 0 : index
    %c0_96 = arith.constant 0 : index
    %89 = vector.load %arg3[%c2_93, %c1_94, %c0_95, %c0_96] : memref<4x2x32x1xf32, #tpu.memory_space<vmem>>, vector<1x1x32x1xf32>
    %90 = vector.shape_cast %89 : vector<1x1x32x1xf32> to vector<32x1xf32>
    %91 = vector.broadcast %80 : vector<8x1xf32> to vector<8x128xf32>
    %92 = arith.addf %78, %91 : vector<8x128xf32>
    %93 = vector.broadcast %82 : vector<8x1xf32> to vector<8x128xf32>
    %94 = arith.mulf %92, %93 : vector<8x128xf32>
    %c2_97 = arith.constant 2 : index
    %c0_98 = arith.constant 0 : index
    %c0_99 = arith.constant 0 : index
    %95 = vector.load %arg4[%c2_97, %c0_98, %c0_99] : memref<4x32x8xf32, #tpu.memory_space<vmem>>, vector<1x32x8xf32>
    %96 = vector.shape_cast %95 : vector<1x32x8xf32> to vector<32x8xf32>
    %cst_100 = arith.constant dense<0.000000e+00> : vector<32x128xf32>
    %97 = tpu.matmul %96, %94, %cst_100 {dimension_numbers = #tpu.dot_dimension_numbers<[1], [0], [0], [1], [0, 0, 1, 1], [], []>} : vector<32x8xf32>, vector<8x128xf32>, vector<32x128xf32> -> vector<32x128xf32>
    %98 = vector.broadcast %88 : vector<32x1xf32> to vector<32x128xf32>
    %99 = arith.addf %97, %98 : vector<32x128xf32>
    %cst_101 = arith.constant 0.000000e+00 : f32
    %100 = vector.broadcast %cst_101 : f32 to vector<32x128xf32>
    %101 = arith.maximumf %99, %100 : vector<32x128xf32>
    %c2_102 = arith.constant 2 : index
    %c0_103 = arith.constant 0 : index
    %c0_104 = arith.constant 0 : index
    %102 = vector.load %arg5[%c2_102, %c0_103, %c0_104] : memref<4x32x32xf32, #tpu.memory_space<vmem>>, vector<1x32x32xf32>
    %103 = vector.shape_cast %102 : vector<1x32x32xf32> to vector<32x32xf32>
    %cst_105 = arith.constant dense<0.000000e+00> : vector<32x128xf32>
    %104 = tpu.matmul %103, %101, %cst_105 {dimension_numbers = #tpu.dot_dimension_numbers<[1], [0], [0], [1], [0, 0, 1, 1], [], []>} : vector<32x32xf32>, vector<32x128xf32>, vector<32x128xf32> -> vector<32x128xf32>
    %105 = vector.broadcast %90 : vector<32x1xf32> to vector<32x128xf32>
    %106 = arith.addf %104, %105 : vector<32x128xf32>
    %cst_106 = arith.constant 0.000000e+00 : f32
    %107 = vector.broadcast %cst_106 : f32 to vector<32x128xf32>
    %108 = arith.maximumf %106, %107 : vector<32x128xf32>
    %c2_107 = arith.constant 2 : index
    %c0_108 = arith.constant 0 : index
    %c0_109 = arith.constant 0 : index
    %109 = vector.load %arg6[%c2_107, %c0_108, %c0_109] : memref<4x8x32xf32, #tpu.memory_space<vmem>>, vector<1x8x32xf32>
    %110 = vector.shape_cast %109 : vector<1x8x32xf32> to vector<8x32xf32>
    %cst_110 = arith.constant dense<0.000000e+00> : vector<8x128xf32>
    %111 = tpu.matmul %110, %108, %cst_110 {dimension_numbers = #tpu.dot_dimension_numbers<[1], [0], [0], [1], [0, 0, 1, 1], [], []>} : vector<8x32xf32>, vector<32x128xf32>, vector<8x128xf32> -> vector<8x128xf32>
    %112 = vector.broadcast %86 : vector<8x1xf32> to vector<8x128xf32>
    %113 = arith.addf %111, %112 : vector<8x128xf32>
    %114 = math.tanh %113 : vector<8x128xf32>
    %115 = vector.broadcast %84 : vector<8x1xf32> to vector<8x128xf32>
    %116 = arith.mulf %115, %114 : vector<8x128xf32>
    %117 = arith.addf %94, %116 : vector<8x128xf32>
    %c3_111 = arith.constant 3 : index
    %c0_112 = arith.constant 0 : index
    %c0_113 = arith.constant 0 : index
    %c0_114 = arith.constant 0 : index
    %118 = vector.load %arg2[%c3_111, %c0_112, %c0_113, %c0_114] : memref<4x4x8x1xf32, #tpu.memory_space<vmem>>, vector<1x1x8x1xf32>
    %119 = vector.shape_cast %118 : vector<1x1x8x1xf32> to vector<8x1xf32>
    %c3_115 = arith.constant 3 : index
    %c1_116 = arith.constant 1 : index
    %c0_117 = arith.constant 0 : index
    %c0_118 = arith.constant 0 : index
    %120 = vector.load %arg2[%c3_115, %c1_116, %c0_117, %c0_118] : memref<4x4x8x1xf32, #tpu.memory_space<vmem>>, vector<1x1x8x1xf32>
    %121 = vector.shape_cast %120 : vector<1x1x8x1xf32> to vector<8x1xf32>
    %c3_119 = arith.constant 3 : index
    %c2_120 = arith.constant 2 : index
    %c0_121 = arith.constant 0 : index
    %c0_122 = arith.constant 0 : index
    %122 = vector.load %arg2[%c3_119, %c2_120, %c0_121, %c0_122] : memref<4x4x8x1xf32, #tpu.memory_space<vmem>>, vector<1x1x8x1xf32>
    %123 = vector.shape_cast %122 : vector<1x1x8x1xf32> to vector<8x1xf32>
    %c3_123 = arith.constant 3 : index
    %c3_124 = arith.constant 3 : index
    %c0_125 = arith.constant 0 : index
    %c0_126 = arith.constant 0 : index
    %124 = vector.load %arg2[%c3_123, %c3_124, %c0_125, %c0_126] : memref<4x4x8x1xf32, #tpu.memory_space<vmem>>, vector<1x1x8x1xf32>
    %125 = vector.shape_cast %124 : vector<1x1x8x1xf32> to vector<8x1xf32>
    %c3_127 = arith.constant 3 : index
    %c0_128 = arith.constant 0 : index
    %c0_129 = arith.constant 0 : index
    %c0_130 = arith.constant 0 : index
    %126 = vector.load %arg3[%c3_127, %c0_128, %c0_129, %c0_130] : memref<4x2x32x1xf32, #tpu.memory_space<vmem>>, vector<1x1x32x1xf32>
    %127 = vector.shape_cast %126 : vector<1x1x32x1xf32> to vector<32x1xf32>
    %c3_131 = arith.constant 3 : index
    %c1_132 = arith.constant 1 : index
    %c0_133 = arith.constant 0 : index
    %c0_134 = arith.constant 0 : index
    %128 = vector.load %arg3[%c3_131, %c1_132, %c0_133, %c0_134] : memref<4x2x32x1xf32, #tpu.memory_space<vmem>>, vector<1x1x32x1xf32>
    %129 = vector.shape_cast %128 : vector<1x1x32x1xf32> to vector<32x1xf32>
    %130 = vector.broadcast %119 : vector<8x1xf32> to vector<8x128xf32>
    %131 = arith.addf %117, %130 : vector<8x128xf32>
    %132 = vector.broadcast %121 : vector<8x1xf32> to vector<8x128xf32>
    %133 = arith.mulf %131, %132 : vector<8x128xf32>
    %c3_135 = arith.constant 3 : index
    %c0_136 = arith.constant 0 : index
    %c0_137 = arith.constant 0 : index
    %134 = vector.load %arg4[%c3_135, %c0_136, %c0_137] : memref<4x32x8xf32, #tpu.memory_space<vmem>>, vector<1x32x8xf32>
    %135 = vector.shape_cast %134 : vector<1x32x8xf32> to vector<32x8xf32>
    %cst_138 = arith.constant dense<0.000000e+00> : vector<32x128xf32>
    %136 = tpu.matmul %135, %133, %cst_138 {dimension_numbers = #tpu.dot_dimension_numbers<[1], [0], [0], [1], [0, 0, 1, 1], [], []>} : vector<32x8xf32>, vector<8x128xf32>, vector<32x128xf32> -> vector<32x128xf32>
    %137 = vector.broadcast %127 : vector<32x1xf32> to vector<32x128xf32>
    %138 = arith.addf %136, %137 : vector<32x128xf32>
    %cst_139 = arith.constant 0.000000e+00 : f32
    %139 = vector.broadcast %cst_139 : f32 to vector<32x128xf32>
    %140 = arith.maximumf %138, %139 : vector<32x128xf32>
    %c3_140 = arith.constant 3 : index
    %c0_141 = arith.constant 0 : index
    %c0_142 = arith.constant 0 : index
    %141 = vector.load %arg5[%c3_140, %c0_141, %c0_142] : memref<4x32x32xf32, #tpu.memory_space<vmem>>, vector<1x32x32xf32>
    %142 = vector.shape_cast %141 : vector<1x32x32xf32> to vector<32x32xf32>
    %cst_143 = arith.constant dense<0.000000e+00> : vector<32x128xf32>
    %143 = tpu.matmul %142, %140, %cst_143 {dimension_numbers = #tpu.dot_dimension_numbers<[1], [0], [0], [1], [0, 0, 1, 1], [], []>} : vector<32x32xf32>, vector<32x128xf32>, vector<32x128xf32> -> vector<32x128xf32>
    %144 = vector.broadcast %129 : vector<32x1xf32> to vector<32x128xf32>
    %145 = arith.addf %143, %144 : vector<32x128xf32>
    %cst_144 = arith.constant 0.000000e+00 : f32
    %146 = vector.broadcast %cst_144 : f32 to vector<32x128xf32>
    %147 = arith.maximumf %145, %146 : vector<32x128xf32>
    %c3_145 = arith.constant 3 : index
    %c0_146 = arith.constant 0 : index
    %c0_147 = arith.constant 0 : index
    %148 = vector.load %arg6[%c3_145, %c0_146, %c0_147] : memref<4x8x32xf32, #tpu.memory_space<vmem>>, vector<1x8x32xf32>
    %149 = vector.shape_cast %148 : vector<1x8x32xf32> to vector<8x32xf32>
    %cst_148 = arith.constant dense<0.000000e+00> : vector<8x128xf32>
    %150 = tpu.matmul %149, %147, %cst_148 {dimension_numbers = #tpu.dot_dimension_numbers<[1], [0], [0], [1], [0, 0, 1, 1], [], []>} : vector<8x32xf32>, vector<32x128xf32>, vector<8x128xf32> -> vector<8x128xf32>
    %151 = vector.broadcast %125 : vector<8x1xf32> to vector<8x128xf32>
    %152 = arith.addf %150, %151 : vector<8x128xf32>
    %153 = math.tanh %152 : vector<8x128xf32>
    %154 = vector.broadcast %123 : vector<8x1xf32> to vector<8x128xf32>
    %155 = arith.mulf %154, %153 : vector<8x128xf32>
    %156 = arith.addf %133, %155 : vector<8x128xf32>
    %157 = arith.mulf %156, %156 : vector<8x128xf32>
    %cst_149 = arith.constant dense<0.000000e+00> : vector<128xf32>
    %158 = vector.multi_reduction <add>, %157, %cst_149 [0] : vector<8x128xf32> to vector<128xf32>
    %159 = vector.shape_cast %158 : vector<128xf32> to vector<1x128xf32>
    %cst_150 = arith.constant -5.000000e-01 : f32
    %160 = vector.broadcast %cst_150 : f32 to vector<1x128xf32>
    %161 = arith.mulf %160, %159 : vector<1x128xf32>
    %cst_151 = arith.constant 6.28318548 : f32
    %162 = math.log %cst_151 : f32
    %cst_152 = arith.constant -5.000000e-01 : f32
    %163 = arith.mulf %cst_152, %162 : f32
    %cst_153 = arith.constant 8.000000e+00 : f32
    %164 = arith.mulf %cst_153, %163 : f32
    %165 = vector.broadcast %164 : f32 to vector<1x128xf32>
    %166 = arith.addf %161, %165 : vector<1x128xf32>
    %c0_154 = arith.constant 0 : index
    %c0_155 = arith.constant 0 : index
    %167 = vector.load %arg7[%c0_154, %c0_155] : memref<1x128xf32, #tpu.memory_space<vmem>>, vector<1x128xf32>
    tpu.vector_store %arg7[%c0_154, %c0_155], %166 {strides = array<i32>} : memref<1x128xf32, #tpu.memory_space<vmem>>, vector<1x128xf32>,
    return
  }
  func.func @transform_0(%arg0: i32) -> (i32, i32) {
    %c0_i32 = arith.constant 0 : i32
    %c0_i32_0 = arith.constant 0 : i32
    return %c0_i32, %arg0 : i32, i32
  }
  func.func @transform_1(%arg0: i32) -> (i32, i32, i32, i32) {
    %c0_i32 = arith.constant 0 : i32
    %c0_i32_0 = arith.constant 0 : i32
    %c0_i32_1 = arith.constant 0 : i32
    %c0_i32_2 = arith.constant 0 : i32
    %c0_i32_3 = arith.constant 0 : i32
    return %c0_i32, %c0_i32_0, %c0_i32_1, %c0_i32_2 : i32, i32, i32, i32
  }
  func.func @transform_2(%arg0: i32) -> (i32, i32, i32, i32) {
    %c0_i32 = arith.constant 0 : i32
    %c0_i32_0 = arith.constant 0 : i32
    %c0_i32_1 = arith.constant 0 : i32
    %c0_i32_2 = arith.constant 0 : i32
    %c0_i32_3 = arith.constant 0 : i32
    return %c0_i32, %c0_i32_0, %c0_i32_1, %c0_i32_2 : i32, i32, i32, i32
  }
  func.func @transform_3(%arg0: i32) -> (i32, i32, i32) {
    %c0_i32 = arith.constant 0 : i32
    %c0_i32_0 = arith.constant 0 : i32
    %c0_i32_1 = arith.constant 0 : i32
    %c0_i32_2 = arith.constant 0 : i32
    return %c0_i32, %c0_i32_0, %c0_i32_1 : i32, i32, i32
  }
  func.func @transform_4(%arg0: i32) -> (i32, i32, i32) {
    %c0_i32 = arith.constant 0 : i32
    %c0_i32_0 = arith.constant 0 : i32
    %c0_i32_1 = arith.constant 0 : i32
    %c0_i32_2 = arith.constant 0 : i32
    return %c0_i32, %c0_i32_0, %c0_i32_1 : i32, i32, i32
  }
  func.func @transform_5(%arg0: i32) -> (i32, i32, i32) {
    %c0_i32 = arith.constant 0 : i32
    %c0_i32_0 = arith.constant 0 : i32
    %c0_i32_1 = arith.constant 0 : i32
    %c0_i32_2 = arith.constant 0 : i32
    return %c0_i32, %c0_i32_0, %c0_i32_1 : i32, i32, i32
  }
  func.func @transform_6(%arg0: i32) -> (i32, i32) {
    %c0_i32 = arith.constant 0 : i32
    %c0_i32_0 = arith.constant 0 : i32
    return %c0_i32, %arg0 : i32, i32
  }
}

</mosaic_0001>

<llo_original>
// kernel: tpu_custom_call.1
$region0: #{tpu_custom_call.1}
  #allocation0 [shape = 'u32[]', space=smem, size = 0x4, offset = 0x4, fixed_abs, tag = 'smem constant byte address 0x4 - core index']
  #allocation1 [shape = 'u32[72,128]{1,0:T(1,128)}', space=vmem, size = 0x9000, scoped, tag = 'internal scratch']
  %s0 = inlined_call_operand.vmem [shape: f32[8,128], index: 0, kind: input, shape index: {}]
  %s1 = inlined_call_operand.vmem [shape: f32[4,4,8,1], index: 1, kind: input, shape index: {}]
  %s2 = inlined_call_operand.vmem [shape: f32[4,2,32,1], index: 2, kind: input, shape index: {}]
  %s3 = inlined_call_operand.vmem [shape: f32[4,32,8], index: 3, kind: input, shape index: {}]
  %s4 = inlined_call_operand.vmem [shape: f32[4,32,32], index: 4, kind: input, shape index: {}]
  %s5 = inlined_call_operand.vmem [shape: f32[4,8,32], index: 5, kind: input, shape index: {}]
  %s6 = inlined_call_operand.hbm [shape: f32[1,128], index: 6, kind: output, shape index: {}]
  %s7 = sld [smem:[#allocation0]]
  $region34: #{tpu_custom_call.1} parent=0
    _
  %s9 = ssub.s32 1, %s7
  %s10 = scalar_select 0, %s9, %s7
  $region1: #{tpu_custom_call.1} parent=0
    #allocation2 [shape = 'u8[512]{0}', space=vmem, size = 0x400, scoped, tag = 'output window, operand 0, single buffered']
    #allocation3 [shape = 's32[1]{0}', space=sflag, size = 0x4, scoped, tag = 'scoped memory for tpu_custom_call.1']
    %11 = vsyncpa [#allocation3], 0
    // Predicated region
    $region2: #{tpu_custom_call.1} parent=1 // pred_check
      _
    $region3: #{tpu_custom_call.1} parent=1 // pred_check_branch
      %13 = sbr.rel (0) target = $region5
    $region4: #{tpu_custom_call.1} parent=1 // pred_region
      _
    $region5: #{tpu_custom_call.1} parent=1 // pred_fallthru
      _
    // Predicated region
    $region6: #{tpu_custom_call.1} parent=1 // pred_check
      _
    $region7: #{tpu_custom_call.1} parent=1 // pred_check_branch
      %15 = sbr.rel (0) target = $region9
    $region8: #{tpu_custom_call.1} parent=1 // pred_region
      _
    $region9: #{tpu_custom_call.1} parent=1 // pred_fallthru
      _
    // Predicated region
    $region10: #{tpu_custom_call.1} parent=1 // pred_check
      _
    $region11: #{tpu_custom_call.1} parent=1 // pred_check_branch
      %17 = sbr.rel (0) target = $region13
    $region12: #{tpu_custom_call.1} parent=1 // pred_region
      _
    $region13: #{tpu_custom_call.1} parent=1 // pred_fallthru
      _
    // Predicated region
    $region14: #{tpu_custom_call.1} parent=1 // pred_check
      _
    $region15: #{tpu_custom_call.1} parent=1 // pred_check_branch
      %19 = sbr.rel (0) target = $region17
    $region16: #{tpu_custom_call.1} parent=1 // pred_region
      _
    $region17: #{tpu_custom_call.1} parent=1 // pred_fallthru
      _
    // Predicated region
    $region18: #{tpu_custom_call.1} parent=1 // pred_check
      _
    $region19: #{tpu_custom_call.1} parent=1 // pred_check_branch
      %21 = sbr.rel (0) target = $region21
    $region20: #{tpu_custom_call.1} parent=1 // pred_region
      _
    $region21: #{tpu_custom_call.1} parent=1 // pred_fallthru
      _
    // Predicated region
    $region22: #{tpu_custom_call.1} parent=1 // pred_check
      _
    $region23: #{tpu_custom_call.1} parent=1 // pred_check_branch
      %23 = sbr.rel (0) target = $region25
    $region24: #{tpu_custom_call.1} parent=1 // pred_region
      _
    $region25: #{tpu_custom_call.1} parent=1 // pred_fallthru
      _
    %v24 = vld [vmem:[%s0] sm:$0xff]
    %v25 = vld [vmem:[%s1] sm:$0xff]
    %s26 = scalar_lea.vmem %s1, 8
    %v27 = vld [vmem:[%s26] sm:$0xff]
    %s28 = scalar_lea.vmem %s1, 16
    %v29 = vld [vmem:[%s28] sm:$0xff]
    %s30 = scalar_lea.vmem %s1, 24
    %v31 = vld [vmem:[%s30] sm:$0xff]
    %v32 = vld [vmem:[%s2] sm:$0xff]
    %v33 = vld [vmem:[%s2 + $0x8] sm:$0xff]
    %v34 = vld [vmem:[%s2 + $0x10] sm:$0xff]
    %v35 = vld [vmem:[%s2 + $0x18] sm:$0xff]
    %s36 = scalar_lea.vmem %s2, 32
    %v37 = vld [vmem:[%s36] sm:$0xff]
    %v38 = vld [vmem:[%s36 + $0x8] sm:$0xff]
    %v39 = vld [vmem:[%s36 + $0x10] sm:$0xff]
    %v40 = vld [vmem:[%s36 + $0x18] sm:$0xff]
    %42 = vset.pattern.permute.xlu0 0
    %43 = vperm.xlu0 %42, %v25
    %v44 = vpop.permute.xlu0 %43
    %v46 = vadd.f32 %v24, %v44
    %48 = vset.pattern.permute.xlu0 0
    %49 = vperm.xlu0 %48, %v27
    %v50 = vpop.permute.xlu0 %49
    %v52 = vmul.f32 %v46, %v50
    %v53 = vld [vmem:[%s3] sm:$0xff]
    %v54 = vld [vmem:[%s3 + $0x8] sm:$0xff]
    %v55 = vld [vmem:[%s3 + $0x10] sm:$0xff]
    %v56 = vld [vmem:[%s3 + $0x18] sm:$0xff]
    %58 = vset.pattern.permute.xlu0 0
    %59 = vperm.xlu0 %58, %v32
    %v60 = vpop.permute.xlu0 %59
    %63 = vset.pattern.permute.xlu0 0
    %64 = vperm.xlu0 %63, %v33
    %v65 = vpop.permute.xlu0 %64
    %68 = vset.pattern.permute.xlu0 0
    %69 = vperm.xlu0 %68, %v34
    %v70 = vpop.permute.xlu0 %69
    %73 = vset.pattern.permute.xlu0 0
    %74 = vperm.xlu0 %73, %v35
    %v75 = vpop.permute.xlu0 %74
    %vm77 = vcmask 64512
    %v79 = vsel %vm77, %v53, 0
    %v82 = vsel %vm77, %v54, 0
    %v85 = vsel %vm77, %v55, 0
    %v88 = vsel %vm77, %v56, 0
    %90 = vmatpush.msra.mxu0 0.0
    %91 = vmatpush.msra.mxu0 0.0
    %92 = vmatpush.msra.mxu0 0.0
    %93 = vmatpush.msra.mxu0 0.0
    %94 = vmatpush.msra.mxu0 0.0
    %95 = vmatpush.msra.mxu0 0.0
    %96 = vmatpush.msra.mxu0 0.0
    %97 = vmatpush.msra.mxu0 0.0
    %98 = vmatpush.msra.mxu0 0.0
    %99 = vmatpush.msra.mxu0 0.0
    %100 = vmatpush.msra.mxu0 0.0
    %101 = vmatpush.msra.mxu0 0.0
    %102 = vmatpush.msra.mxu0 0.0
    %103 = vmatpush.msra.mxu0 0.0
    %104 = vmatpush.msra.mxu0 0.0
    %105 = vmatpush.msra.mxu0 %v52
    %106 = vmatmul.f32.gmra.mxu0 %v79
    %v107 = vpop.f32.mrf.mxu0
    %v108 = vadd.f32 %v60, %v107
    %109 = vmatmul.f32.gmra.mxu0 %v82
    %v110 = vpop.f32.mrf.mxu0
    %v111 = vadd.f32 %v65, %v110
    %112 = vmatmul.f32.gmra.mxu0 %v85
    %v113 = vpop.f32.mrf.mxu0
    %v114 = vadd.f32 %v70, %v113
    %115 = vmatmul.f32.gmra.mxu0 %v88
    %v116 = vpop.f32.mrf.mxu0
    %v117 = vadd.f32 %v75, %v116
    %118 = vdwg.mxu0
    %v119 = vmax.f32 %v108, 0.0
    %v120 = vmax.f32 %v111, 0.0
    %v121 = vmax.f32 %v114, 0.0
    %v122 = vmax.f32 %v117, 0.0
    %v123 = vld [vmem:[%s4] sm:$0xff]
    %v124 = vld [vmem:[%s4 + $0x8] sm:$0xff]
    %v125 = vld [vmem:[%s4 + $0x10] sm:$0xff]
    %v126 = vld [vmem:[%s4 + $0x18] sm:$0xff]
    %128 = vset.pattern.permute.xlu0 0
    %129 = vperm.xlu0 %128, %v37
    %v130 = vpop.permute.xlu0 %129
    %133 = vset.pattern.permute.xlu0 0
    %134 = vperm.xlu0 %133, %v38
    %v135 = vpop.permute.xlu0 %134
    %138 = vset.pattern.permute.xlu0 0
    %139 = vperm.xlu0 %138, %v39
    %v140 = vpop.permute.xlu0 %139
    %143 = vset.pattern.permute.xlu0 0
    %144 = vperm.xlu0 %143, %v40
    %v145 = vpop.permute.xlu0 %144
    %vm147 = vcmask 261120
    %v149 = vsel %vm147, %v123, 0
    %v152 = vsel %vm147, %v124, 0
    %v155 = vsel %vm147, %v125, 0
    %v158 = vsel %vm147, %v126, 0
    %160 = vmatpush.msra.mxu0 0.0
    %161 = vmatpush.msra.mxu0 0.0
    %162 = vmatpush.msra.mxu0 0.0
    %163 = vmatpush.msra.mxu0 0.0
    %164 = vmatpush.msra.mxu0 0.0
    %165 = vmatpush.msra.mxu0 0.0
    %166 = vmatpush.msra.mxu0 0.0
    %167 = vmatpush.msra.mxu0 0.0
    %168 = vmatpush.msra.mxu0 0.0
    %169 = vmatpush.msra.mxu0 0.0
    %170 = vmatpush.msra.mxu0 0.0
    %171 = vmatpush.msra.mxu0 0.0
    %172 = vmatpush.msra.mxu0 %v122
    %173 = vmatpush.msra.mxu0 %v121
    %174 = vmatpush.msra.mxu0 %v120
    %175 = vmatpush.msra.mxu0 %v119
    %176 = vmatmul.f32.gmra.mxu0 %v149
    %v177 = vpop.f32.mrf.mxu0
    %v178 = vadd.f32 %v130, %v177
    %179 = vmatmul.f32.gmra.mxu0 %v152
    %v180 = vpop.f32.mrf.mxu0
    %v181 = vadd.f32 %v135, %v180
    %182 = vmatmul.f32.gmra.mxu0 %v155
    %v183 = vpop.f32.mrf.mxu0
    %v184 = vadd.f32 %v140, %v183
    %185 = vmatmul.f32.gmra.mxu0 %v158
    %v186 = vpop.f32.mrf.mxu0
    %v187 = vadd.f32 %v145, %v186
    %188 = vdwg.mxu0
    %v189 = vmax.f32 %v178, 0.0
    %v190 = vmax.f32 %v181, 0.0
    %v191 = vmax.f32 %v184, 0.0
    %v192 = vmax.f32 %v187, 0.0
    %v193 = vld [vmem:[%s5] sm:$0xff]
    %195 = vset.pattern.permute.xlu0 0
    %196 = vperm.xlu0 %195, %v31
    %v197 = vpop.permute.xlu0 %196
    %v200 = vsel %vm147, %v193, 0
    %202 = vmatpush.msra.mxu0 0.0
    %203 = vmatpush.msra.mxu0 0.0
    %204 = vmatpush.msra.mxu0 0.0
    %205 = vmatpush.msra.mxu0 0.0
    %206 = vmatpush.msra.mxu0 0.0
    %207 = vmatpush.msra.mxu0 0.0
    %208 = vmatpush.msra.mxu0 0.0
    %209 = vmatpush.msra.mxu0 0.0
    %210 = vmatpush.msra.mxu0 0.0
    %211 = vmatpush.msra.mxu0 0.0
    %212 = vmatpush.msra.mxu0 0.0
    %213 = vmatpush.msra.mxu0 0.0
    %214 = vmatpush.msra.mxu0 %v192
    %215 = vmatpush.msra.mxu0 %v191
    %216 = vmatpush.msra.mxu0 %v190
    %217 = vmatpush.msra.mxu0 %v189
    %218 = vmatmul.f32.gmra.mxu0 %v200
    %v219 = vpop.f32.mrf.mxu0
    %v220 = vadd.f32 %v197, %v219
    %221 = vdwg.mxu0
    %v222 = vtanh.pop %v220
    %224 = vset.pattern.permute.xlu0 0
    %225 = vperm.xlu0 %224, %v29
    %v226 = vpop.permute.xlu0 %225
    %v228 = vmul.f32 %v226, %v222
    %v229 = vadd.f32 %v52, %v228
    %s230 = scalar_lea.vmem %s1, 32
    %v231 = vld [vmem:[%s230] sm:$0xff]
    %s232 = scalar_lea.vmem %s1, 40
    %v233 = vld [vmem:[%s232] sm:$0xff]
    %s234 = scalar_lea.vmem %s1, 48
    %v235 = vld [vmem:[%s234] sm:$0xff]
    %s236 = scalar_lea.vmem %s1, 56
    %v237 = vld [vmem:[%s236] sm:$0xff]
    %s238 = scalar_lea.vmem %s2, 64
    %v239 = vld [vmem:[%s238] sm:$0xff]
    %v240 = vld [vmem:[%s238 + $0x8] sm:$0xff]
    %v241 = vld [vmem:[%s238 + $0x10] sm:$0xff]
    %v242 = vld [vmem:[%s238 + $0x18] sm:$0xff]
    %s243 = scalar_lea.vmem %s2, 96
    %v244 = vld [vmem:[%s243] sm:$0xff]
    %v245 = vld [vmem:[%s243 + $0x8] sm:$0xff]
    %v246 = vld [vmem:[%s243 + $0x10] sm:$0xff]
    %v247 = vld [vmem:[%s243 + $0x18] sm:$0xff]
    %249 = vset.pattern.permute.xlu0 0
    %250 = vperm.xlu0 %249, %v231
    %v251 = vpop.permute.xlu0 %250
    %v253 = vadd.f32 %v229, %v251
    %255 = vset.pattern.permute.xlu0 0
    %256 = vperm.xlu0 %255, %v233
    %v257 = vpop.permute.xlu0 %256
    %v259 = vmul.f32 %v253, %v257
    %s260 = scalar_lea.vmem %s3, 32
    %v261 = vld [vmem:[%s260] sm:$0xff]
    %v262 = vld [vmem:[%s260 + $0x8] sm:$0xff]
    %v263 = vld [vmem:[%s260 + $0x10] sm:$0xff]
    %v264 = vld [vmem:[%s260 + $0x18] sm:$0xff]
    %266 = vset.pattern.permute.xlu0 0
    %267 = vperm.xlu0 %266, %v239
    %v268 = vpop.permute.xlu0 %267
    %271 = vset.pattern.permute.xlu0 0
    %272 = vperm.xlu0 %271, %v240
    %v273 = vpop.permute.xlu0 %272
    %276 = vset.pattern.permute.xlu0 0
    %277 = vperm.xlu0 %276, %v241
    %v278 = vpop.permute.xlu0 %277
    %281 = vset.pattern.permute.xlu0 0
    %282 = vperm.xlu0 %281, %v242
    %v283 = vpop.permute.xlu0 %282
    %v286 = vsel %vm77, %v261, 0
    %v289 = vsel %vm77, %v262, 0
    %v292 = vsel %vm77, %v263, 0
    %v295 = vsel %vm77, %v264, 0
    %297 = vmatpush.msra.mxu0 0.0
    %298 = vmatpush.msra.mxu0 0.0
    %299 = vmatpush.msra.mxu0 0.0
    %300 = vmatpush.msra.mxu0 0.0
    %301 = vmatpush.msra.mxu0 0.0
    %302 = vmatpush.msra.mxu0 0.0
    %303 = vmatpush.msra.mxu0 0.0
    %304 = vmatpush.msra.mxu0 0.0
    %305 = vmatpush.msra.mxu0 0.0
    %306 = vmatpush.msra.mxu0 0.0
    %307 = vmatpush.msra.mxu0 0.0
    %308 = vmatpush.msra.mxu0 0.0
    %309 = vmatpush.msra.mxu0 0.0
    %310 = vmatpush.msra.mxu0 0.0
    %311 = vmatpush.msra.mxu0 0.0
    %312 = vmatpush.msra.mxu0 %v259
    %313 = vmatmul.f32.gmra.mxu0 %v286
    %v314 = vpop.f32.mrf.mxu0
    %v315 = vadd.f32 %v268, %v314
    %316 = vmatmul.f32.gmra.mxu0 %v289
    %v317 = vpop.f32.mrf.mxu0
    %v318 = vadd.f32 %v273, %v317
    %319 = vmatmul.f32.gmra.mxu0 %v292
    %v320 = vpop.f32.mrf.mxu0
    %v321 = vadd.f32 %v278, %v320
    %322 = vmatmul.f32.gmra.mxu0 %v295
    %v323 = vpop.f32.mrf.mxu0
    %v324 = vadd.f32 %v283, %v323
    %325 = vdwg.mxu0
    %v326 = vmax.f32 %v315, 0.0
    %v327 = vmax.f32 %v318, 0.0
    %v328 = vmax.f32 %v321, 0.0
    %v329 = vmax.f32 %v324, 0.0
    %s330 = scalar_lea.vmem %s4, 32
    %v331 = vld [vmem:[%s330] sm:$0xff]
    %v332 = vld [vmem:[%s330 + $0x8] sm:$0xff]
    %v333 = vld [vmem:[%s330 + $0x10] sm:$0xff]
    %v334 = vld [vmem:[%s330 + $0x18] sm:$0xff]
    %336 = vset.pattern.permute.xlu0 0
    %337 = vperm.xlu0 %336, %v244
    %v338 = vpop.permute.xlu0 %337
    %341 = vset.pattern.permute.xlu0 0
    %342 = vperm.xlu0 %341, %v245
    %v343 = vpop.permute.xlu0 %342
    %346 = vset.pattern.permute.xlu0 0
    %347 = vperm.xlu0 %346, %v246
    %v348 = vpop.permute.xlu0 %347
    %351 = vset.pattern.permute.xlu0 0
    %352 = vperm.xlu0 %351, %v247
    %v353 = vpop.permute.xlu0 %352
    %v356 = vsel %vm147, %v331, 0
    %v359 = vsel %vm147, %v332, 0
    %v362 = vsel %vm147, %v333, 0
    %v365 = vsel %vm147, %v334, 0
    %367 = vmatpush.msra.mxu0 0.0
    %368 = vmatpush.msra.mxu0 0.0
    %369 = vmatpush.msra.mxu0 0.0
    %370 = vmatpush.msra.mxu0 0.0
    %371 = vmatpush.msra.mxu0 0.0
    %372 = vmatpush.msra.mxu0 0.0
    %373 = vmatpush.msra.mxu0 0.0
    %374 = vmatpush.msra.mxu0 0.0
    %375 = vmatpush.msra.mxu0 0.0
    %376 = vmatpush.msra.mxu0 0.0
    %377 = vmatpush.msra.mxu0 0.0
    %378 = vmatpush.msra.mxu0 0.0
    %379 = vmatpush.msra.mxu0 %v329
    %380 = vmatpush.msra.mxu0 %v328
    %381 = vmatpush.msra.mxu0 %v327
    %382 = vmatpush.msra.mxu0 %v326
    %383 = vmatmul.f32.gmra.mxu0 %v356
    %v384 = vpop.f32.mrf.mxu0
    %v385 = vadd.f32 %v338, %v384
    %386 = vmatmul.f32.gmra.mxu0 %v359
    %v387 = vpop.f32.mrf.mxu0
    %v388 = vadd.f32 %v343, %v387
    %389 = vmatmul.f32.gmra.mxu0 %v362
    %v390 = vpop.f32.mrf.mxu0
    %v391 = vadd.f32 %v348, %v390
    %392 = vmatmul.f32.gmra.mxu0 %v365
    %v393 = vpop.f32.mrf.mxu0
    %v394 = vadd.f32 %v353, %v393
    %395 = vdwg.mxu0
    %v396 = vmax.f32 %v385, 0.0
    %v397 = vmax.f32 %v388, 0.0
    %v398 = vmax.f32 %v391, 0.0
    %v399 = vmax.f32 %v394, 0.0
    %s400 = scalar_lea.vmem %s5, 8
    %v401 = vld [vmem:[%s400] sm:$0xff]
    %403 = vset.pattern.permute.xlu0 0
    %404 = vperm.xlu0 %403, %v237
    %v405 = vpop.permute.xlu0 %404
    %v408 = vsel %vm147, %v401, 0
    %410 = vmatpush.msra.mxu0 0.0
    %411 = vmatpush.msra.mxu0 0.0
    %412 = vmatpush.msra.mxu0 0.0
    %413 = vmatpush.msra.mxu0 0.0
    %414 = vmatpush.msra.mxu0 0.0
    %415 = vmatpush.msra.mxu0 0.0
    %416 = vmatpush.msra.mxu0 0.0
    %417 = vmatpush.msra.mxu0 0.0
    %418 = vmatpush.msra.mxu0 0.0
    %419 = vmatpush.msra.mxu0 0.0
    %420 = vmatpush.msra.mxu0 0.0
    %421 = vmatpush.msra.mxu0 0.0
    %422 = vmatpush.msra.mxu0 %v399
    %423 = vmatpush.msra.mxu0 %v398
    %424 = vmatpush.msra.mxu0 %v397
    %425 = vmatpush.msra.mxu0 %v396
    %426 = vmatmul.f32.gmra.mxu0 %v408
    %v427 = vpop.f32.mrf.mxu0
    %v428 = vadd.f32 %v405, %v427
    %429 = vdwg.mxu0
    %v430 = vtanh.pop %v428
    %432 = vset.pattern.permute.xlu0 0
    %433 = vperm.xlu0 %432, %v235
    %v434 = vpop.permute.xlu0 %433
    %v436 = vmul.f32 %v434, %v430
    %v437 = vadd.f32 %v259, %v436
    %s438 = scalar_lea.vmem %s1, 64
    %v439 = vld [vmem:[%s438] sm:$0xff]
    %s440 = scalar_lea.vmem %s1, 72
    %v441 = vld [vmem:[%s440] sm:$0xff]
    %s442 = scalar_lea.vmem %s1, 80
    %v443 = vld [vmem:[%s442] sm:$0xff]
    %s444 = scalar_lea.vmem %s1, 88
    %v445 = vld [vmem:[%s444] sm:$0xff]
    %s446 = scalar_lea.vmem %s2, 128
    %v447 = vld [vmem:[%s446] sm:$0xff]
    %v448 = vld [vmem:[%s446 + $0x8] sm:$0xff]
    %v449 = vld [vmem:[%s446 + $0x10] sm:$0xff]
    %v450 = vld [vmem:[%s446 + $0x18] sm:$0xff]
    %s451 = scalar_lea.vmem %s2, 160
    %v452 = vld [vmem:[%s451] sm:$0xff]
    %v453 = vld [vmem:[%s451 + $0x8] sm:$0xff]
    %v454 = vld [vmem:[%s451 + $0x10] sm:$0xff]
    %v455 = vld [vmem:[%s451 + $0x18] sm:$0xff]
    %457 = vset.pattern.permute.xlu0 0
    %458 = vperm.xlu0 %457, %v439
    %v459 = vpop.permute.xlu0 %458
    %v461 = vadd.f32 %v437, %v459
    %463 = vset.pattern.permute.xlu0 0
    %464 = vperm.xlu0 %463, %v441
    %v465 = vpop.permute.xlu0 %464
    %v467 = vmul.f32 %v461, %v465
    %s468 = scalar_lea.vmem %s3, 64
    %v469 = vld [vmem:[%s468] sm:$0xff]
    %v470 = vld [vmem:[%s468 + $0x8] sm:$0xff]
    %v471 = vld [vmem:[%s468 + $0x10] sm:$0xff]
    %v472 = vld [vmem:[%s468 + $0x18] sm:$0xff]
    %474 = vset.pattern.permute.xlu0 0
    %475 = vperm.xlu0 %474, %v447
    %v476 = vpop.permute.xlu0 %475
    %479 = vset.pattern.permute.xlu0 0
    %480 = vperm.xlu0 %479, %v448
    %v481 = vpop.permute.xlu0 %480
    %484 = vset.pattern.permute.xlu0 0
    %485 = vperm.xlu0 %484, %v449
    %v486 = vpop.permute.xlu0 %485
    %489 = vset.pattern.permute.xlu0 0
    %490 = vperm.xlu0 %489, %v450
    %v491 = vpop.permute.xlu0 %490
    %v494 = vsel %vm77, %v469, 0
    %v497 = vsel %vm77, %v470, 0
    %v500 = vsel %vm77, %v471, 0
    %v503 = vsel %vm77, %v472, 0
    %505 = vmatpush.msra.mxu0 0.0
    %506 = vmatpush.msra.mxu0 0.0
    %507 = vmatpush.msra.mxu0 0.0
    %508 = vmatpush.msra.mxu0 0.0
    %509 = vmatpush.msra.mxu0 0.0
    %510 = vmatpush.msra.mxu0 0.0
    %511 = vmatpush.msra.mxu0 0.0
    %512 = vmatpush.msra.mxu0 0.0
    %513 = vmatpush.msra.mxu0 0.0
    %514 = vmatpush.msra.mxu0 0.0
    %515 = vmatpush.msra.mxu0 0.0
    %516 = vmatpush.msra.mxu0 0.0
    %517 = vmatpush.msra.mxu0 0.0
    %518 = vmatpush.msra.mxu0 0.0
    %519 = vmatpush.msra.mxu0 0.0
    %520 = vmatpush.msra.mxu0 %v467
    %521 = vmatmul.f32.gmra.mxu0 %v494
    %v522 = vpop.f32.mrf.mxu0
    %v523 = vadd.f32 %v476, %v522
    %524 = vmatmul.f32.gmra.mxu0 %v497
    %v525 = vpop.f32.mrf.mxu0
    %v526 = vadd.f32 %v481, %v525
    %527 = vmatmul.f32.gmra.mxu0 %v500
    %v528 = vpop.f32.mrf.mxu0
    %v529 = vadd.f32 %v486, %v528
    %530 = vmatmul.f32.gmra.mxu0 %v503
    %v531 = vpop.f32.mrf.mxu0
    %v532 = vadd.f32 %v491, %v531
    %533 = vdwg.mxu0
    %v534 = vmax.f32 %v523, 0.0
    %v535 = vmax.f32 %v526, 0.0
    %v536 = vmax.f32 %v529, 0.0
    %v537 = vmax.f32 %v532, 0.0
    %s538 = scalar_lea.vmem %s4, 64
    %v539 = vld [vmem:[%s538] sm:$0xff]
    %v540 = vld [vmem:[%s538 + $0x8] sm:$0xff]
    %v541 = vld [vmem:[%s538 + $0x10] sm:$0xff]
    %v542 = vld [vmem:[%s538 + $0x18] sm:$0xff]
    %544 = vset.pattern.permute.xlu0 0
    %545 = vperm.xlu0 %544, %v452
    %v546 = vpop.permute.xlu0 %545
    %549 = vset.pattern.permute.xlu0 0
    %550 = vperm.xlu0 %549, %v453
    %v551 = vpop.permute.xlu0 %550
    %554 = vset.pattern.permute.xlu0 0
    %555 = vperm.xlu0 %554, %v454
    %v556 = vpop.permute.xlu0 %555
    %559 = vset.pattern.permute.xlu0 0
    %560 = vperm.xlu0 %559, %v455
    %v561 = vpop.permute.xlu0 %560
    %v564 = vsel %vm147, %v539, 0
    %v567 = vsel %vm147, %v540, 0
    %v570 = vsel %vm147, %v541, 0
    %v573 = vsel %vm147, %v542, 0
    %575 = vmatpush.msra.mxu0 0.0
    %576 = vmatpush.msra.mxu0 0.0
    %577 = vmatpush.msra.mxu0 0.0
    %578 = vmatpush.msra.mxu0 0.0
    %579 = vmatpush.msra.mxu0 0.0
    %580 = vmatpush.msra.mxu0 0.0
    %581 = vmatpush.msra.mxu0 0.0
    %582 = vmatpush.msra.mxu0 0.0
    %583 = vmatpush.msra.mxu0 0.0
    %584 = vmatpush.msra.mxu0 0.0
    %585 = vmatpush.msra.mxu0 0.0
    %586 = vmatpush.msra.mxu0 0.0
    %587 = vmatpush.msra.mxu0 %v537
    %588 = vmatpush.msra.mxu0 %v536
    %589 = vmatpush.msra.mxu0 %v535
    %590 = vmatpush.msra.mxu0 %v534
    %591 = vmatmul.f32.gmra.mxu0 %v564
    %v592 = vpop.f32.mrf.mxu0
    %v593 = vadd.f32 %v546, %v592
    %594 = vmatmul.f32.gmra.mxu0 %v567
    %v595 = vpop.f32.mrf.mxu0
    %v596 = vadd.f32 %v551, %v595
    %597 = vmatmul.f32.gmra.mxu0 %v570
    %v598 = vpop.f32.mrf.mxu0
    %v599 = vadd.f32 %v556, %v598
    %600 = vmatmul.f32.gmra.mxu0 %v573
    %v601 = vpop.f32.mrf.mxu0
    %v602 = vadd.f32 %v561, %v601
    %603 = vdwg.mxu0
    %v604 = vmax.f32 %v593, 0.0
    %v605 = vmax.f32 %v596, 0.0
    %v606 = vmax.f32 %v599, 0.0
    %v607 = vmax.f32 %v602, 0.0
    %s608 = scalar_lea.vmem %s5, 16
    %v609 = vld [vmem:[%s608] sm:$0xff]
    %611 = vset.pattern.permute.xlu0 0
    %612 = vperm.xlu0 %611, %v445
    %v613 = vpop.permute.xlu0 %612
    %v616 = vsel %vm147, %v609, 0
    %618 = vmatpush.msra.mxu0 0.0
    %619 = vmatpush.msra.mxu0 0.0
    %620 = vmatpush.msra.mxu0 0.0
    %621 = vmatpush.msra.mxu0 0.0
    %622 = vmatpush.msra.mxu0 0.0
    %623 = vmatpush.msra.mxu0 0.0
    %624 = vmatpush.msra.mxu0 0.0
    %625 = vmatpush.msra.mxu0 0.0
    %626 = vmatpush.msra.mxu0 0.0
    %627 = vmatpush.msra.mxu0 0.0
    %628 = vmatpush.msra.mxu0 0.0
    %629 = vmatpush.msra.mxu0 0.0
    %630 = vmatpush.msra.mxu0 %v607
    %631 = vmatpush.msra.mxu0 %v606
    %632 = vmatpush.msra.mxu0 %v605
    %633 = vmatpush.msra.mxu0 %v604
    %634 = vmatmul.f32.gmra.mxu0 %v616
    %v635 = vpop.f32.mrf.mxu0
    %v636 = vadd.f32 %v613, %v635
    %637 = vdwg.mxu0
    %v638 = vtanh.pop %v636
    %640 = vset.pattern.permute.xlu0 0
    %641 = vperm.xlu0 %640, %v443
    %v642 = vpop.permute.xlu0 %641
    %v644 = vmul.f32 %v642, %v638
    %v645 = vadd.f32 %v467, %v644
    %s646 = scalar_lea.vmem %s1, 96
    %v647 = vld [vmem:[%s646] sm:$0xff]
    %s648 = scalar_lea.vmem %s1, 104
    %v649 = vld [vmem:[%s648] sm:$0xff]
    %s650 = scalar_lea.vmem %s1, 112
    %v651 = vld [vmem:[%s650] sm:$0xff]
    %s652 = scalar_lea.vmem %s1, 120
    %v653 = vld [vmem:[%s652] sm:$0xff]
    %s654 = scalar_lea.vmem %s2, 192
    %v655 = vld [vmem:[%s654] sm:$0xff]
    %v656 = vld [vmem:[%s654 + $0x8] sm:$0xff]
    %v657 = vld [vmem:[%s654 + $0x10] sm:$0xff]
    %v658 = vld [vmem:[%s654 + $0x18] sm:$0xff]
    %s659 = scalar_lea.vmem %s2, 224
    %v660 = vld [vmem:[%s659] sm:$0xff]
    %v661 = vld [vmem:[%s659 + $0x8] sm:$0xff]
    %v662 = vld [vmem:[%s659 + $0x10] sm:$0xff]
    %v663 = vld [vmem:[%s659 + $0x18] sm:$0xff]
    %665 = vset.pattern.permute.xlu0 0
    %666 = vperm.xlu0 %665, %v647
    %v667 = vpop.permute.xlu0 %666
    %v669 = vadd.f32 %v645, %v667
    %671 = vset.pattern.permute.xlu0 0
    %672 = vperm.xlu0 %671, %v649
    %v673 = vpop.permute.xlu0 %672
    %v675 = vmul.f32 %v669, %v673
    %s676 = scalar_lea.vmem %s3, 96
    %v677 = vld [vmem:[%s676] sm:$0xff]
    %v678 = vld [vmem:[%s676 + $0x8] sm:$0xff]
    %v679 = vld [vmem:[%s676 + $0x10] sm:$0xff]
    %v680 = vld [vmem:[%s676 + $0x18] sm:$0xff]
    %682 = vset.pattern.permute.xlu0 0
    %683 = vperm.xlu0 %682, %v655
    %v684 = vpop.permute.xlu0 %683
    %687 = vset.pattern.permute.xlu0 0
    %688 = vperm.xlu0 %687, %v656
    %v689 = vpop.permute.xlu0 %688
    %692 = vset.pattern.permute.xlu0 0
    %693 = vperm.xlu0 %692, %v657
    %v694 = vpop.permute.xlu0 %693
    %697 = vset.pattern.permute.xlu0 0
    %698 = vperm.xlu0 %697, %v658
    %v699 = vpop.permute.xlu0 %698
    %v702 = vsel %vm77, %v677, 0
    %v705 = vsel %vm77, %v678, 0
    %v708 = vsel %vm77, %v679, 0
    %v711 = vsel %vm77, %v680, 0
    %713 = vmatpush.msra.mxu0 0.0
    %714 = vmatpush.msra.mxu0 0.0
    %715 = vmatpush.msra.mxu0 0.0
    %716 = vmatpush.msra.mxu0 0.0
    %717 = vmatpush.msra.mxu0 0.0
    %718 = vmatpush.msra.mxu0 0.0
    %719 = vmatpush.msra.mxu0 0.0
    %720 = vmatpush.msra.mxu0 0.0
    %721 = vmatpush.msra.mxu0 0.0
    %722 = vmatpush.msra.mxu0 0.0
    %723 = vmatpush.msra.mxu0 0.0
    %724 = vmatpush.msra.mxu0 0.0
    %725 = vmatpush.msra.mxu0 0.0
    %726 = vmatpush.msra.mxu0 0.0
    %727 = vmatpush.msra.mxu0 0.0
    %728 = vmatpush.msra.mxu0 %v675
    %729 = vmatmul.f32.gmra.mxu0 %v702
    %v730 = vpop.f32.mrf.mxu0
    %v731 = vadd.f32 %v684, %v730
    %732 = vmatmul.f32.gmra.mxu0 %v705
    %v733 = vpop.f32.mrf.mxu0
    %v734 = vadd.f32 %v689, %v733
    %735 = vmatmul.f32.gmra.mxu0 %v708
    %v736 = vpop.f32.mrf.mxu0
    %v737 = vadd.f32 %v694, %v736
    %738 = vmatmul.f32.gmra.mxu0 %v711
    %v739 = vpop.f32.mrf.mxu0
    %v740 = vadd.f32 %v699, %v739
    %741 = vdwg.mxu0
    %v742 = vmax.f32 %v731, 0.0
    %v743 = vmax.f32 %v734, 0.0
    %v744 = vmax.f32 %v737, 0.0
    %v745 = vmax.f32 %v740, 0.0
    %s746 = scalar_lea.vmem %s4, 96
    %v747 = vld [vmem:[%s746] sm:$0xff]
    %v748 = vld [vmem:[%s746 + $0x8] sm:$0xff]
    %v749 = vld [vmem:[%s746 + $0x10] sm:$0xff]
    %v750 = vld [vmem:[%s746 + $0x18] sm:$0xff]
    %752 = vset.pattern.permute.xlu0 0
    %753 = vperm.xlu0 %752, %v660
    %v754 = vpop.permute.xlu0 %753
    %757 = vset.pattern.permute.xlu0 0
    %758 = vperm.xlu0 %757, %v661
    %v759 = vpop.permute.xlu0 %758
    %762 = vset.pattern.permute.xlu0 0
    %763 = vperm.xlu0 %762, %v662
    %v764 = vpop.permute.xlu0 %763
    %767 = vset.pattern.permute.xlu0 0
    %768 = vperm.xlu0 %767, %v663
    %v769 = vpop.permute.xlu0 %768
    %v772 = vsel %vm147, %v747, 0
    %v775 = vsel %vm147, %v748, 0
    %v778 = vsel %vm147, %v749, 0
    %v781 = vsel %vm147, %v750, 0
    %783 = vmatpush.msra.mxu0 0.0
    %784 = vmatpush.msra.mxu0 0.0
    %785 = vmatpush.msra.mxu0 0.0
    %786 = vmatpush.msra.mxu0 0.0
    %787 = vmatpush.msra.mxu0 0.0
    %788 = vmatpush.msra.mxu0 0.0
    %789 = vmatpush.msra.mxu0 0.0
    %790 = vmatpush.msra.mxu0 0.0
    %791 = vmatpush.msra.mxu0 0.0
    %792 = vmatpush.msra.mxu0 0.0
    %793 = vmatpush.msra.mxu0 0.0
    %794 = vmatpush.msra.mxu0 0.0
    %795 = vmatpush.msra.mxu0 %v745
    %796 = vmatpush.msra.mxu0 %v744
    %797 = vmatpush.msra.mxu0 %v743
    %798 = vmatpush.msra.mxu0 %v742
    %799 = vmatmul.f32.gmra.mxu0 %v772
    %v800 = vpop.f32.mrf.mxu0
    %v801 = vadd.f32 %v754, %v800
    %802 = vmatmul.f32.gmra.mxu0 %v775
    %v803 = vpop.f32.mrf.mxu0
    %v804 = vadd.f32 %v759, %v803
    %805 = vmatmul.f32.gmra.mxu0 %v778
    %v806 = vpop.f32.mrf.mxu0
    %v807 = vadd.f32 %v764, %v806
    %808 = vmatmul.f32.gmra.mxu0 %v781
    %v809 = vpop.f32.mrf.mxu0
    %v810 = vadd.f32 %v769, %v809
    %811 = vdwg.mxu0
    %v812 = vmax.f32 %v801, 0.0
    %v813 = vmax.f32 %v804, 0.0
    %v814 = vmax.f32 %v807, 0.0
    %v815 = vmax.f32 %v810, 0.0
    %s816 = scalar_lea.vmem %s5, 24
    %v817 = vld [vmem:[%s816] sm:$0xff]
    %819 = vset.pattern.permute.xlu0 0
    %820 = vperm.xlu0 %819, %v653
    %v821 = vpop.permute.xlu0 %820
    %v824 = vsel %vm147, %v817, 0
    %826 = vmatpush.msra.mxu0 0.0
    %827 = vmatpush.msra.mxu0 0.0
    %828 = vmatpush.msra.mxu0 0.0
    %829 = vmatpush.msra.mxu0 0.0
    %830 = vmatpush.msra.mxu0 0.0
    %831 = vmatpush.msra.mxu0 0.0
    %832 = vmatpush.msra.mxu0 0.0
    %833 = vmatpush.msra.mxu0 0.0
    %834 = vmatpush.msra.mxu0 0.0
    %835 = vmatpush.msra.mxu0 0.0
    %836 = vmatpush.msra.mxu0 0.0
    %837 = vmatpush.msra.mxu0 0.0
    %838 = vmatpush.msra.mxu0 %v815
    %839 = vmatpush.msra.mxu0 %v814
    %840 = vmatpush.msra.mxu0 %v813
    %841 = vmatpush.msra.mxu0 %v812
    %842 = vmatmul.f32.gmra.mxu0 %v824
    %v843 = vpop.f32.mrf.mxu0
    %v844 = vadd.f32 %v821, %v843
    %845 = vdwg.mxu0
    %v846 = vtanh.pop %v844
    %848 = vset.pattern.permute.xlu0 0
    %849 = vperm.xlu0 %848, %v651
    %v850 = vpop.permute.xlu0 %849
    %v852 = vmul.f32 %v850, %v846
    %v853 = vadd.f32 %v675, %v852
    %v854 = vmul.f32 %v853, %v853
    %v855 = vrot.slane %v854, 4
    %v856 = vadd.f32 %v854, %v855
    %v857 = vrot.slane %v856, 2
    %v858 = vadd.f32 %v856, %v857
    %v859 = vrot.slane %v858, 1
    %v860 = vadd.f32 %v858, %v859
    %v861 = vmul.f32 %v860, -0.5
    %v862 = vadd.f32 %v861, -7.351508
    %863 = vst [vmem:[#allocation2] sm:$0x1] %v862
    // Predicated region
    $region26: #{tpu_custom_call.1} parent=1 // pred_check
      _
    $region27: #{tpu_custom_call.1} parent=1 // pred_check_branch
      %865 = sbr.rel (0) target = $region29
    $region28: #{tpu_custom_call.1} parent=1 // pred_region
      %867 = vsyncadd [#allocation3], 0
      %s869 = sshll.u32 [#allocation2], 4
      %s870 = int_to_ptr.vmem [resolvable:$true] %s869
      %s871 = sshll.u32 %s6, 4
      %s872 = int_to_ptr.hbm [resolvable:$true] %s871
      %874 = dma.vmem_to_hbm [thread:$0]  %s870, 16, %s872, [#allocation3]
    $region29: #{tpu_custom_call.1} parent=1 // pred_fallthru
      _
    // Predicated region
    $region30: #{tpu_custom_call.1} parent=1 // pred_check
      _
    $region31: #{tpu_custom_call.1} parent=1 // pred_check_branch
      %876 = sbr.rel (0) target = $region33
    $region32: #{tpu_custom_call.1} parent=1 // pred_region
      %878 = dma.done [#allocation3], 16
    $region33: #{tpu_custom_call.1} parent=1 // pred_fallthru
      _
    %879 = vsyncpa [#allocation3], 1

</llo_original>
